<compile_context>
chip_gen: v7x
topology: tpu7x:2x2x1
jax: 0.10.0
libtpu: 0.0.40
codegen_flags: <defaults>
</compile_context>

<pallas_src>
import jax
import jax.numpy as jnp
from jax.experimental import pallas as pl
from jax.experimental.pallas import tpu as pltpu

_LANES = 512            # lane-dense width (multiple of 128)
_MAX_BLOCK_ROWS = 1024  # (1024, 512) f32 block = 2 MiB per input per buffer


def _make_kernel(n_valid, block_rows, lanes):
    """Builds the tiled BCE partial-sum kernel, closing over static sizes."""

    def kernel(x_ref, t_ref, out_ref):
        pid = pl.program_id(0)
        last = pl.num_programs(0) - 1

        x = x_ref[...].astype(jnp.float32)
        t = t_ref[...].astype(jnp.float32)

        # sigmoid -> clamped logs, exactly mirroring BCELoss(sigmoid(x)).
        # (manual sigmoid keeps the lowering to exp + div, always supported.)
        p = 1.0 / (1.0 + jnp.exp(-x))
        log_p = jnp.maximum(jnp.log(p), -100.0)
        log_1mp = jnp.maximum(jnp.log(1.0 - p), -100.0)
        # factored: t*log_p + (1-t)*log_1mp == log_1mp + t*(log_p - log_1mp)
        bce = -(log_1mp + t * (log_p - log_1mp))

        @pl.when(pid != last)
        def _interior():
            # Interior blocks contain only valid data: reduce directly.
            out_ref[...] = jnp.sum(bce, axis=0, keepdims=True).reshape(1, 1, lanes)

        @pl.when(pid == last)
        def _edge():
            # Only the final block can contain lane-pad zeros or ragged-edge
            # garbage rows; mask them out by flat element index before summing
            # (jnp.where is a select, so NaN/garbage is zeroed safely).
            row = jax.lax.broadcasted_iota(jnp.int32, bce.shape, 0)
            lane = jax.lax.broadcasted_iota(jnp.int32, bce.shape, 1)
            gidx = (pid * block_rows + row) * lanes + lane
            masked = jnp.where(gidx < n_valid, bce, 0.0)
            out_ref[...] = jnp.sum(masked, axis=0, keepdims=True).reshape(1, 1, lanes)

    return kernel


def multi_class_bce_loss(logits, targets, mask=None):
    """logits, targets: (B, #actions).  Returns (scalar f32 loss, None).

    `mask` is accepted but unused — the reference PyTorch module ignores it too.
    """
    del mask
    B, A = logits.shape
    n = B * A
    lanes = _LANES

    rows = pl.cdiv(n, lanes)
    pad = rows * lanes - n

    def _prep(a):
        flat = a.reshape(-1)          # free (row-major contiguous)
        if pad:
            # TODO(synk): when n % 512 != 0 this still materializes one copy;
            # could be hidden with CompilerParams(allow_input_fusion=...).
            flat = jnp.pad(flat, (0, pad))
        return flat.reshape(rows, lanes)

    x2d = _prep(logits)
    t2d = _prep(targets)

    # Single full-extent block when everything fits in one 2 MiB tile,
    # otherwise fixed 1024-row blocks with a ragged (masked) last block.
    block_rows = rows if rows <= _MAX_BLOCK_ROWS else _MAX_BLOCK_ROWS
    num_blocks = pl.cdiv(rows, block_rows)

    kernel = _make_kernel(n, block_rows, lanes)

    in_bytes = x2d.size * x2d.dtype.itemsize + t2d.size * t2d.dtype.itemsize
    out_bytes = num_blocks * lanes * 4
    cost = pl.CostEstimate(
        flops=10 * rows * lanes,
        transcendentals=4 * rows * lanes,
        bytes_accessed=in_bytes + out_bytes,
    )

    partials = pl.pallas_call(
        kernel,
        out_shape=jax.ShapeDtypeStruct((num_blocks, 1, lanes), jnp.float32),
        grid=(num_blocks,),
        in_specs=[
            pl.BlockSpec((block_rows, lanes), lambda i: (i, 0)),
            pl.BlockSpec((block_rows, lanes), lambda i: (i, 0)),
        ],
        out_specs=pl.BlockSpec((1, 1, lanes), lambda i: (i, 0, 0)),
        compiler_params=pltpu.CompilerParams(
            dimension_semantics=("parallel",),   # both TCs on v7x; no carry
            vmem_limit_bytes=32 * 1024 * 1024,
        ),
        cost_estimate=cost,
    )(x2d, t2d)

    loss = jnp.sum(partials) / jnp.float32(n)
    return loss, None


def _reference(logits, targets):
    # Pure-JAX mirror of the PyTorch per-column loop
    # (sigmoid -> BCELoss with log clamp at -100, mean per column, mean of columns).
    t = targets.astype(jnp.float32)
    p = jax.nn.sigmoid(logits.astype(jnp.float32))
    log_p = jnp.maximum(jnp.log(p), -100.0)
    log_1mp = jnp.maximum(jnp.log(1.0 - p), -100.0)
    bce = -(t * log_p + (1.0 - t) * log_1mp)
    per_col = jnp.mean(bce, axis=0)
    return jnp.sum(per_col) / logits.shape[-1]


if __name__ == "__main__":
    key = jax.random.PRNGKey(0)

    cases = [
        (4, 8),       # nominal tiny shape: single row, lane-pad + mask path
        (64, 24),     # 1536 = 3*512: no pad, single full-extent block
        (1100, 500),  # multi-block grid with a ragged, masked last block
    ]
    for idx, (B, A) in enumerate(cases):
        key, k1, k2 = jax.random.split(key, 3)
        logits = jax.random.normal(k1, (B, A), dtype=jnp.float32)
        targets = (jax.random.uniform(k2, (B, A)) > 0.5).astype(jnp.float32)

        loss, _ = multi_class_bce_loss(logits, targets)
        loss = jax.block_until_ready(loss)
        ref = _reference(logits, targets)
        assert jnp.allclose(loss, ref, atol=1e-5, rtol=1e-5), (idx, loss, ref)

    print("KERNEL_OK")
</pallas_src>

<mosaic_0001>
module attributes {stable_mosaic.version = 11 : i64} {
  func.func @kernel(%arg0: i32, %arg1: memref<1x512xf32, #tpu.memory_space<vmem>>, %arg2: memref<1x512xf32, #tpu.memory_space<vmem>>, %arg3: memref<1x1x512xf32, #tpu.memory_space<vmem>>) attributes {dimension_semantics = [#tpu.dimension_semantics<parallel>], iteration_bounds = array<i64: 1>, scalar_prefetch = 0 : i64, scratch_operands = 0 : i64, tpu.core_type = #tpu.core_type<tc>, window_params = [{transform_indices = @transform_0, window_bounds = array<i64: 1, 512>}, {transform_indices = @transform_1, window_bounds = array<i64: 1, 512>}, {transform_indices = @transform_2, window_bounds = array<i64: 1, 1, 512>}]} {
    %c0 = arith.constant 0 : index
    %c0_0 = arith.constant 0 : index
    %0 = vector.load %arg1[%c0, %c0_0] : memref<1x512xf32, #tpu.memory_space<vmem>>, vector<1x512xf32>
    %c0_1 = arith.constant 0 : index
    %c0_2 = arith.constant 0 : index
    %1 = vector.load %arg2[%c0_1, %c0_2] : memref<1x512xf32, #tpu.memory_space<vmem>>, vector<1x512xf32>
    %cst = arith.constant 0.000000e+00 : f32
    %2 = vector.broadcast %cst : f32 to vector<1x512xf32>
    %3 = arith.subf %2, %0 : vector<1x512xf32>
    %4 = math.exp %3 : vector<1x512xf32>
    %cst_3 = arith.constant 1.000000e+00 : f32
    %5 = vector.broadcast %cst_3 : f32 to vector<1x512xf32>
    %6 = arith.addf %5, %4 : vector<1x512xf32>
    %cst_4 = arith.constant 1.000000e+00 : f32
    %7 = vector.broadcast %cst_4 : f32 to vector<1x512xf32>
    %8 = arith.divf %7, %6 : vector<1x512xf32>
    %9 = math.log %8 : vector<1x512xf32>
    %cst_5 = arith.constant -1.000000e+02 : f32
    %10 = vector.broadcast %cst_5 : f32 to vector<1x512xf32>
    %11 = arith.maximumf %9, %10 : vector<1x512xf32>
    %cst_6 = arith.constant 1.000000e+00 : f32
    %12 = vector.broadcast %cst_6 : f32 to vector<1x512xf32>
    %13 = arith.subf %12, %8 : vector<1x512xf32>
    %14 = math.log %13 : vector<1x512xf32>
    %cst_7 = arith.constant -1.000000e+02 : f32
    %15 = vector.broadcast %cst_7 : f32 to vector<1x512xf32>
    %16 = arith.maximumf %14, %15 : vector<1x512xf32>
    %17 = arith.subf %11, %16 : vector<1x512xf32>
    %18 = arith.mulf %1, %17 : vector<1x512xf32>
    %19 = arith.addf %16, %18 : vector<1x512xf32>
    %cst_8 = arith.constant 0.000000e+00 : f32
    %20 = vector.broadcast %cst_8 : f32 to vector<1x512xf32>
    %21 = arith.subf %20, %19 : vector<1x512xf32>
    %c0_i32 = arith.constant 0 : i32
    %22 = arith.cmpi ne, %arg0, %c0_i32 : i32
    %23 = arith.extui %22 : i1 to i32
    %c0_i32_9 = arith.constant 0 : i32
    %24 = arith.cmpi ne, %23, %c0_i32_9 : i32
    scf.if %24 {
      %cst_12 = arith.constant dense<0.000000e+00> : vector<512xf32>
      %28 = vector.multi_reduction <add>, %21, %cst_12 [0] : vector<1x512xf32> to vector<512xf32>
      %29 = vector.shape_cast %28 : vector<512xf32> to vector<1x512xf32>
      %30 = vector.shape_cast %29 : vector<1x512xf32> to vector<1x1x512xf32>
      %c0_13 = arith.constant 0 : index
      %c0_14 = arith.constant 0 : index
      %c0_15 = arith.constant 0 : index
      %31 = vector.load %arg3[%c0_13, %c0_14, %c0_15] : memref<1x1x512xf32, #tpu.memory_space<vmem>>, vector<1x1x512xf32>
      tpu.vector_store %arg3[%c0_13, %c0_14, %c0_15], %30 {strides = array<i32>} : memref<1x1x512xf32, #tpu.memory_space<vmem>>, vector<1x1x512xf32>,
    } else {
    }
    %c0_i32_10 = arith.constant 0 : i32
    %25 = arith.cmpi eq, %arg0, %c0_i32_10 : i32
    %26 = arith.extui %25 : i1 to i32
    %c0_i32_11 = arith.constant 0 : i32
    %27 = arith.cmpi ne, %26, %c0_i32_11 : i32
    scf.if %27 {
      %28 = tpu.iota {dimensions = array<i32: 0>} : vector<1x512xi32>
      %29 = tpu.iota {dimensions = array<i32: 1>} : vector<1x512xi32>
      %c1_i32 = arith.constant 1 : i32
      %30 = arith.muli %arg0, %c1_i32 : i32
      %31 = vector.broadcast %30 : i32 to vector<1x512xi32>
      %32 = arith.addi %31, %28 : vector<1x512xi32>
      %c512_i32 = arith.constant 512 : i32
      %33 = vector.broadcast %c512_i32 : i32 to vector<1x512xi32>
      %34 = arith.muli %32, %33 : vector<1x512xi32>
      %35 = arith.addi %34, %29 : vector<1x512xi32>
      %c32_i32 = arith.constant 32 : i32
      %36 = vector.broadcast %c32_i32 : i32 to vector<1x512xi32>
      %37 = arith.cmpi slt, %35, %36 : vector<1x512xi32>
      %cst_12 = arith.constant 0.000000e+00 : f32
      %38 = vector.broadcast %cst_12 : f32 to vector<1x512xf32>
      %39 = arith.select %37, %21, %38 : vector<1x512xi1>, vector<1x512xf32>
      %cst_13 = arith.constant dense<0.000000e+00> : vector<512xf32>
      %40 = vector.multi_reduction <add>, %39, %cst_13 [0] : vector<1x512xf32> to vector<512xf32>
      %41 = vector.shape_cast %40 : vector<512xf32> to vector<1x512xf32>
      %42 = vector.shape_cast %41 : vector<1x512xf32> to vector<1x1x512xf32>
      %c0_14 = arith.constant 0 : index
      %c0_15 = arith.constant 0 : index
      %c0_16 = arith.constant 0 : index
      %43 = vector.load %arg3[%c0_14, %c0_15, %c0_16] : memref<1x1x512xf32, #tpu.memory_space<vmem>>, vector<1x1x512xf32>
      tpu.vector_store %arg3[%c0_14, %c0_15, %c0_16], %42 {strides = array<i32>} : memref<1x1x512xf32, #tpu.memory_space<vmem>>, vector<1x1x512xf32>,
    } else {
    }
    return
  }
  func.func @transform_0(%arg0: i32) -> (i32, i32) {
    %c0_i32 = arith.constant 0 : i32
    %c0_i32_0 = arith.constant 0 : i32
    return %arg0, %c0_i32 : i32, i32
  }
  func.func @transform_1(%arg0: i32) -> (i32, i32) {
    %c0_i32 = arith.constant 0 : i32
    %c0_i32_0 = arith.constant 0 : i32
    return %arg0, %c0_i32 : i32, i32
  }
  func.func @transform_2(%arg0: i32) -> (i32, i32, i32) {
    %c0_i32 = arith.constant 0 : i32
    %c0_i32_0 = arith.constant 0 : i32
    %c0_i32_1 = arith.constant 0 : i32
    return %arg0, %c0_i32, %c0_i32_0 : i32, i32, i32
  }
}

</mosaic_0001>

<llo_original>
// kernel: tpu_custom_call.1
$region0: #{tpu_custom_call.1}
  #allocation0 [shape = 'u32[]', space=smem, size = 0x4, offset = 0x4, fixed_abs, tag = 'smem constant byte address 0x4 - core index']
  #allocation1 [shape = 'u32[144,128]{1,0:T(1,128)}', space=vmem, size = 0x12000, scoped, tag = 'internal scratch']
  %s0 = inlined_call_operand.hbm [shape: f32[1,512], index: 0, kind: input, shape index: {}]
  %s1 = inlined_call_operand.hbm [shape: f32[1,512], index: 1, kind: input, shape index: {}]
  %s2 = inlined_call_operand.hbm [shape: f32[1,1,512], index: 2, kind: output, shape index: {}]
  %s3 = sld [smem:[#allocation0]]
  $region34: #{tpu_custom_call.1} parent=0
    _
  %s5 = ssub.s32 1, %s3
  %s6 = scalar_select 0, %s5, %s3
  $region1: #{tpu_custom_call.1} parent=0
    #allocation2 [shape = 'u8[2048]{0}', space=vmem, size = 0x800, scoped, tag = 'input window, operand 0, single buffered']
    #allocation3 [shape = 's32[1]{0}', space=sflag, size = 0x4, scoped, tag = 'scoped memory for tpu_custom_call.1']
    #allocation4 [shape = 's32[1]{0}', space=sflag, size = 0x4, scoped, tag = 'scoped memory for tpu_custom_call.1']
    #allocation5 [shape = 'u8[2048]{0}', space=vmem, size = 0x800, scoped, tag = 'input window, operand 1, single buffered']
    #allocation6 [shape = 's32[1]{0}', space=sflag, size = 0x4, scoped, tag = 'scoped memory for tpu_custom_call.1']
    #allocation7 [shape = 'u8[2048]{0}', space=vmem, size = 0x800, scoped, tag = 'output window, operand 0, single buffered']
    %7 = vsyncpa [#allocation3], 0
    %8 = vsyncpa [#allocation6], 0
    %9 = vsyncpa [#allocation4], 0
    // Predicated region
    $region2: #{tpu_custom_call.1} parent=1 // pred_check
      _
    $region3: #{tpu_custom_call.1} parent=1 // pred_check_branch
      %11 = sbr.rel (0) target = $region5
    $region4: #{tpu_custom_call.1} parent=1 // pred_region
      %s13 = ssub.s32 64, 64
      %14 = vsyncadd [#allocation3], %s13
      %s16 = sshll.u32 [#allocation2], 4
      %s17 = int_to_ptr.vmem [resolvable:$true] %s16
      %19 = dma.hbm_to_vmem [thread:$0]  %s0, 64, %s17, [#allocation3]
    $region5: #{tpu_custom_call.1} parent=1 // pred_fallthru
      _
    // Predicated region
    $region6: #{tpu_custom_call.1} parent=1 // pred_check
      _
    $region7: #{tpu_custom_call.1} parent=1 // pred_check_branch
      %21 = sbr.rel (0) target = $region9
    $region8: #{tpu_custom_call.1} parent=1 // pred_region
      %s23 = ssub.s32 64, 64
      %24 = vsyncadd [#allocation6], %s23
      %s26 = sshll.u32 [#allocation5], 4
      %s27 = int_to_ptr.vmem [resolvable:$true] %s26
      %29 = dma.hbm_to_vmem [thread:$0]  %s1, 64, %s27, [#allocation6]
    $region9: #{tpu_custom_call.1} parent=1 // pred_fallthru
      _
    // Predicated region
    $region10: #{tpu_custom_call.1} parent=1 // pred_check
      _
    $region11: #{tpu_custom_call.1} parent=1 // pred_check_branch
      %31 = sbr.rel (0) target = $region13
    $region12: #{tpu_custom_call.1} parent=1 // pred_region
      %32 = dma.done [#allocation3], 64
    $region13: #{tpu_custom_call.1} parent=1 // pred_fallthru
      _
    // Predicated region
    $region14: #{tpu_custom_call.1} parent=1 // pred_check
      _
    $region15: #{tpu_custom_call.1} parent=1 // pred_check_branch
      %34 = sbr.rel (0) target = $region17
    $region16: #{tpu_custom_call.1} parent=1 // pred_region
      %35 = dma.done [#allocation6], 64
    $region17: #{tpu_custom_call.1} parent=1 // pred_fallthru
      _
    %v36 = vld [vmem:[#allocation2] sm:$0xf]
    %v37 = vld [vmem:[#allocation5] sm:$0xf]
    %v38 = vsub.f32 0.0, %v36
    %v39 = vmul.f32 %v38, 1.442695
    %v40 = vpow.pop %v39
    %v41 = vadd.f32 %v40, 1.0
    %v42 = vrcp.pop %v41
    %v43 = vmul.f32 1.0, %v42
    %v44 = vlog2.pop %v43
    %v45 = vmul.f32 %v44, 0.6931472
    %v46 = vmax.f32 %v45, -100.0
    %v47 = vsub.f32 1.0, %v43
    %v48 = vlog2.pop %v47
    %v49 = vmul.f32 %v48, 0.6931472
    %v50 = vmax.f32 %v49, -100.0
    %v51 = vsub.f32 %v46, %v50
    %v52 = vmul.f32 %v37, %v51
    %v53 = vadd.f32 %v50, %v52
    %v54 = vsub.f32 0.0, %v53
    %p55 = scmp.ne.s32.totalorder 0, 0
    // Predicated region
    $region18: #{tpu_custom_call.1} parent=1 // pred_check
      %p56 = pneg %p55
    $region19: #{tpu_custom_call.1} parent=1 // pred_check_branch
      %58 = sbr.rel (%p56) target = $region21
    $region20: #{tpu_custom_call.1} parent=1 // pred_region
      %v59 = vadd.f32 %v54, 0.0
      %v60 = vlaneseq
      %vm61 = vcmp.ge.s32.totalorder %v60, 0
      %vm62 = vcmp.lt.s32.totalorder %v60, 512
      %vm63 = vmand %vm61, %vm62
      %64 = vst.msk [vmem:[#allocation7] sm:$0xf] %vm63, %v59
    $region21: #{tpu_custom_call.1} parent=1 // pred_fallthru
      _
    %p65 = scmp.eq.s32.totalorder 0, 0
    // Predicated region
    $region22: #{tpu_custom_call.1} parent=1 // pred_check
      %p66 = pneg %p65
    $region23: #{tpu_custom_call.1} parent=1 // pred_check_branch
      %68 = sbr.rel (%p66) target = $region25
    $region24: #{tpu_custom_call.1} parent=1 // pred_region
      %v69 = vlaneseq
      %v70 = vshrl.u32 %v69, 7
      %v71 = vlaneseq
      %v72 = vand.u32 %v71, 127
      %v73 = vadd.s32 %v72, 128
      %v74 = vadd.s32 %v72, 256
      %v75 = vadd.s32 %v72, 384
      %v76 = vstv 0
      %v77 = vadd.s32 %v76, %v70
      %v78 = vmul.u32 %v77, 512
      %v79 = vadd.s32 %v78, %v72
      %v80 = vadd.s32 %v78, %v73
      %v81 = vadd.s32 %v78, %v74
      %v82 = vadd.s32 %v78, %v75
      %vm83 = vcmp.lt.s32.totalorder %v79, 32
      %vm84 = vcmp.lt.s32.totalorder %v80, 32
      %vm85 = vcmp.lt.s32.totalorder %v81, 32
      %vm86 = vcmp.lt.s32.totalorder %v82, 32
      %v88 = vlaneseq
      %v89 = vshrl.u32 %v88, 7
      %v90 = vsub.s32 0, %v89
      %v91 = vrot.slane %v54, %v90
      %v92 = vlaneseq
      %v93 = vshrl.u32 %v92, 7
      %v94 = vsub.s32 1, %v93
      %v95 = vrot.slane %v54, %v94
      %v96 = vlaneseq
      %v97 = vshrl.u32 %v96, 7
      %v98 = vsub.s32 2, %v97
      %v99 = vrot.slane %v54, %v98
      %v100 = vlaneseq
      %v101 = vshrl.u32 %v100, 7
      %v102 = vsub.s32 3, %v101
      %v103 = vrot.slane %v54, %v102
      %v108 = vsel %vm83, %v91, 0.0
      %v109 = vsel %vm84, %v95, 0.0
      %v110 = vsel %vm85, %v99, 0.0
      %v111 = vsel %vm86, %v103, 0.0
      %v112 = vadd.f32 %v108, 0.0
      %v113 = vadd.f32 %v109, 0.0
      %v114 = vadd.f32 %v110, 0.0
      %v115 = vadd.f32 %v111, 0.0
      %v120 = vcombine.low %v112, %v113
      %v121 = vcombine.low %v114, %v115
      %v123 = vunpack.c.l.s4 1966171168
      %v124 = vunpack.c.0.s8 %v123
      %v125 = vlaneseq
      %v126 = vshrl.u32 %v125, 7
      %v127 = vsub.s32 %v124, %v126
      %v128 = vrot.slane %v120, %v127
      %v130 = vunpack.c.l.s4 1966171168
      %v131 = vunpack.c.0.s8 %v130
      %v132 = vlaneseq
      %v133 = vshrl.u32 %v132, 7
      %v134 = vsub.s32 %v131, %v133
      %v135 = vrot.slane %v121, %v134
      %v136 = vcombine.low %v128, %v135
      %v138 = vunpack.c.l.s4 1966171168
      %v139 = vunpack.c.0.s8 %v138
      %v140 = vlaneseq
      %v141 = vshrl.u32 %v140, 7
      %v142 = vsub.s32 %v139, %v141
      %v143 = vrot.slane %v136, %v142
      %v145 = vlaneseq
      %vm146 = vcmp.ge.s32.totalorder %v145, 0
      %vm147 = vcmp.lt.s32.totalorder %v145, 512
      %vm148 = vmand %vm146, %vm147
      %149 = vst.msk [vmem:[#allocation7] sm:$0xf] %vm148, %v143
    $region25: #{tpu_custom_call.1} parent=1 // pred_fallthru
      _
    // Predicated region
    $region26: #{tpu_custom_call.1} parent=1 // pred_check
      _
    $region27: #{tpu_custom_call.1} parent=1 // pred_check_branch
      %151 = sbr.rel (0) target = $region29
    $region28: #{tpu_custom_call.1} parent=1 // pred_region
      %s153 = ssub.s32 64, 64
      %154 = vsyncadd [#allocation4], %s153
      %s156 = sshll.u32 [#allocation7], 4
      %s157 = int_to_ptr.vmem [resolvable:$true] %s156
      %159 = dma.vmem_to_hbm [thread:$0]  %s157, 64, %s2, [#allocation4]
    $region29: #{tpu_custom_call.1} parent=1 // pred_fallthru
      _
    // Predicated region
    $region30: #{tpu_custom_call.1} parent=1 // pred_check
      _
    $region31: #{tpu_custom_call.1} parent=1 // pred_check_branch
      %161 = sbr.rel (0) target = $region33
    $region32: #{tpu_custom_call.1} parent=1 // pred_region
      %162 = dma.done [#allocation4], 64
    $region33: #{tpu_custom_call.1} parent=1 // pred_fallthru
      _
    %163 = vsyncpa [#allocation3], 1
    %164 = vsyncpa [#allocation6], 1
    %165 = vsyncpa [#allocation4], 1

</llo_original>
